<compile_context>
chip_gen: v6e
topology: v6e:2x2x1
jax: 0.10.0
libtpu: 0.0.40
codegen_flags: <defaults>
</compile_context>

<pallas_src>
import functools

import jax
import jax.numpy as jnp
from jax import lax
from jax.experimental import pallas as pl
from jax.experimental.pallas import tpu as pltpu


_EPS_SQ = 1e-24  # (F.normalize eps=1e-12)^2, applied to the squared norm.


def _l2_normalize(v):
    # Matches F.normalize(p=2, dim=-1, eps=1e-12): v / max(||v||, 1e-12),
    # implemented as v * rsqrt(max(||v||^2, 1e-24)) (EUP rsqrt, no divide).
    ss = jnp.sum(v * v, axis=-1, keepdims=True)
    return v * lax.rsqrt(jnp.maximum(ss, _EPS_SQ))


# ---------------------------------------------------------------------------
# Kernel bodies
# ---------------------------------------------------------------------------
def _matching_kernel_my(x_ref, my_ref, o_ref, *, normalize: bool,
                        use_bf16: bool):
    """Folded path: one lane-dense matmul x_n(tl,D) @ MY(D,CRp) -> o(tl,CRp)."""
    x = x_ref[0].astype(jnp.float32)                  # (tl, D)
    if normalize:
        x = _l2_normalize(x)
    my = my_ref[0]                                    # (D, CRp)
    if use_bf16:
        x = x.astype(jnp.bfloat16)
        my = my.astype(jnp.bfloat16)
    out = jnp.dot(x, my, preferred_element_type=jnp.float32)   # (tl, CRp)
    o_ref[0] = out.astype(o_ref.dtype)


def _matching_kernel_xmy(x_ref, m_ref, y_ref, o_ref, *, normalize: bool,
                         channels: int, dim: int, use_bf16: bool):
    """Fallback path (R > D): (x @ M_flat) then per-channel contraction with y,
    storing each channel directly into the (1, C, tl, R) output block."""
    x = x_ref[0].astype(jnp.float32)                  # (tl, D)
    if normalize:
        x = _l2_normalize(x)
    m = m_ref[...]                                    # (D, C*D)
    y = y_ref[0]                                      # (R, D), pre-normalized
    if use_bf16:
        x = x.astype(jnp.bfloat16)
        m = m.astype(jnp.bfloat16)
        y = y.astype(jnp.bfloat16)

    # xm[l, c*D + e] = sum_d x[l, d] * M[c, d, e]  -- all channels at once.
    xm = jnp.dot(x, m, preferred_element_type=jnp.float32)     # (tl, C*D)

    # Contract the shared feature dim of xm_c and y directly (no y.T / XLU).
    dn = (((1,), (1,)), ((), ()))
    for c in range(channels):
        xm_c = xm[:, c * dim:(c + 1) * dim]                    # (tl, D)
        if use_bf16:
            xm_c = xm_c.astype(jnp.bfloat16)
        out_c = lax.dot_general(xm_c, y, dn,
                                preferred_element_type=jnp.float32)  # (tl, R)
        # Direct per-channel store: no concatenated (tl, C*R) intermediate.
        o_ref[0, c] = out_c.astype(o_ref.dtype)


# ---------------------------------------------------------------------------
# Tiling / VMEM sizing helpers
# ---------------------------------------------------------------------------
_VMEM_BUDGET = 40 << 20   # per-step double-buffered budget; fits v7x's 64 MiB


def _step_bytes(t, per_row_elems, fixed_elems):
    # 2 buffers (pipeline double-buffering) x 4 bytes per f32 element.
    return 8 * (t * per_row_elems + fixed_elems)


def _choose_l_tile(L, per_row_elems, fixed_elems):
    """Largest L tile whose double-buffered f32 blocks fit the VMEM budget."""
    if L <= 1024 and _step_bytes(L, per_row_elems, fixed_elems) <= _VMEM_BUDGET:
        return L                                     # full extent: always legal
    for t in (512, 256, 128):
        if t < L and _step_bytes(t, per_row_elems, fixed_elems) <= _VMEM_BUDGET:
            return t
    return min(L, 128)


def _vmem_limit(tl, per_row_elems, fixed_elems):
    need = _step_bytes(tl, per_row_elems, fixed_elems) + (8 << 20)
    return int(min(max(need, 32 << 20), 64 << 20))


# ---------------------------------------------------------------------------
# Forward wrappers
# ---------------------------------------------------------------------------
def _forward_folded(x, y_n, m, B, L, R, D, C, normalize, use_bf16):
    CR = C * R
    CRp = ((CR + 127) // 128) * 128          # lane-dense RHS / output width

    # MY[b, d, c*R + r] = sum_e M[c, d, e] * y_n[b, r, e]   (full f32 precision)
    my = jnp.einsum('cde,bre->bdcr', m, y_n,
                    precision=lax.Precision.HIGHEST).reshape(B, D, CR)
    if CRp != CR:
        my = jnp.pad(my, ((0, 0), (0, 0), (0, CRp - CR)))

    per_row = D + CRp                         # x row + output row elements
    fixed = D * CRp                           # MY[b] block elements
    tl = _choose_l_tile(L, per_row, fixed)
    grid = (B, pl.cdiv(L, tl))

    kernel = functools.partial(_matching_kernel_my, normalize=normalize,
                               use_bf16=use_bf16)
    slab = pl.pallas_call(
        kernel,
        out_shape=jax.ShapeDtypeStruct((B, L, CRp), jnp.float32),
        grid_spec=pltpu.PrefetchScalarGridSpec(
            num_scalar_prefetch=0,
            grid=grid,
            in_specs=[
                pl.BlockSpec((1, tl, D), lambda b, l: (b, l, 0)),    # x tile
                pl.BlockSpec((1, D, CRp), lambda b, l: (b, 0, 0)),   # MY[b] (resident across l)
            ],
            out_specs=pl.BlockSpec((1, tl, CRp), lambda b, l: (b, l, 0)),
        ),
        compiler_params=pltpu.CompilerParams(
            dimension_semantics=("parallel", "parallel"),
            vmem_limit_bytes=_vmem_limit(tl, per_row, fixed),
        ),
    )(x, my)

    # Lane-dense slab (B, L, C*R) -> (B, C, L, R): pure layout plumbing.
    # A consumer that accepts (B, L, C, R) / the slab could skip this transpose.
    return slab[:, :, :CR].reshape(B, L, C, R).transpose(0, 2, 1, 3)


def _forward_xmy(x, y_n, m, B, L, R, D, C, normalize, use_bf16):
    # One-time parameter re-layout: M_flat[d, c*D + e] = M[c, d, e]
    m_flat = jnp.transpose(m, (1, 0, 2)).reshape(D, C * D)

    per_row = D + C * R                      # x row + output row elements
    fixed = D * C * D + R * D                # resident M_flat + y[b] blocks
    tl = _choose_l_tile(L, per_row, fixed)
    grid = (B, pl.cdiv(L, tl))

    kernel = functools.partial(_matching_kernel_xmy, normalize=normalize,
                               channels=C, dim=D, use_bf16=use_bf16)
    # Output is written directly in (B, C, L, R) layout -> no wrapper transpose.
    return pl.pallas_call(
        kernel,
        out_shape=jax.ShapeDtypeStruct((B, C, L, R), jnp.float32),
        grid_spec=pltpu.PrefetchScalarGridSpec(
            num_scalar_prefetch=0,
            grid=grid,
            in_specs=[
                pl.BlockSpec((1, tl, D), lambda b, l: (b, l, 0)),    # x tile
                pl.BlockSpec((D, C * D), lambda b, l: (0, 0)),       # M (resident)
                pl.BlockSpec((1, R, D), lambda b, l: (b, 0, 0)),     # y_n[b] (resident across l)
            ],
            out_specs=pl.BlockSpec((1, C, tl, R), lambda b, l: (b, 0, l, 0)),
        ),
        compiler_params=pltpu.CompilerParams(
            dimension_semantics=("parallel", "parallel"),
            vmem_limit_bytes=_vmem_limit(tl, per_row, fixed),
        ),
    )(x, m_flat, y_n)


def matching_tensor_forward(x, y, interaction_matrix, *, normalize: bool = True,
                            use_bf16_matmul: bool = False):
    """Pallas implementation of MatchingTensor.forward.

    x: (B, L, D), y: (B, R, D), interaction_matrix: (C, D, D)
    returns: (B, C, L, R) float32

    use_bf16_matmul=True casts the MXU operands to bf16 (f32 accumulation);
    ~3-4x matmul throughput on v6e/v7x at reduced precision.
    """
    B, L, D = x.shape
    By, R, Dy = y.shape
    C, Dm, Dm2 = interaction_matrix.shape
    assert B == By and D == Dy and D == Dm and D == Dm2

    x = x.astype(jnp.float32)
    y = y.astype(jnp.float32)
    m = interaction_matrix.astype(jnp.float32)

    if normalize:
        y = _l2_normalize(y)   # normalize y once here; x is normalized in-kernel

    if R <= D:
        # Re-associated einsum: fold (M, y_n) into MY and do 1 matmul per tile.
        return _forward_folded(x, y, m, B, L, R, D, C, normalize, use_bf16_matmul)
    # R > D: folding would add FLOPs; keep the (x @ M) ordering.
    return _forward_xmy(x, y, m, B, L, R, D, C, normalize, use_bf16_matmul)


# ---------------------------------------------------------------------------
# Parameter init (mirrors the module) + reference + self-test
# ---------------------------------------------------------------------------
def init_interaction_matrix(key, matching_dim: int, channels: int,
                            init_diag: bool = True):
    """Deterministic re-implementation of the module's parameter init."""
    if init_diag:
        m = jax.random.uniform(
            key, (channels, matching_dim, matching_dim),
            minval=-0.05, maxval=0.05, dtype=jnp.float32)
        eye = jnp.eye(matching_dim, dtype=jnp.float32)
        m = m * (1.0 - eye)[None] + 0.1 * eye[None]   # fill_diagonal_(0.1)
    else:
        m = jax.random.uniform(
            key, (channels, matching_dim, matching_dim),
            minval=0.0, maxval=1.0, dtype=jnp.float32)
    return m


def _reference(x, y, m, normalize=True):
    if normalize:
        x = x / jnp.maximum(jnp.linalg.norm(x, axis=-1, keepdims=True), 1e-12)
        y = y / jnp.maximum(jnp.linalg.norm(y, axis=-1, keepdims=True), 1e-12)
    return jnp.einsum('bld,cde,bre->bclr', x, m, y,
                      precision=lax.Precision.HIGHEST)


def _check(out, ref, name):
    assert out.shape == ref.shape, (name, out.shape, ref.shape)
    max_err = float(jnp.max(jnp.abs(out - ref)))
    assert jnp.allclose(out, ref, atol=2e-5, rtol=2e-5), (name, max_err)


if __name__ == "__main__":
    key = jax.random.PRNGKey(0)
    k1, k2, k3, k4, k5, k6 = jax.random.split(key, 6)

    # Config 1: R <= D -> folded single-matmul path (C*R=32 padded to 128 lanes)
    B, L, R, D, C = 2, 8, 8, 32, 4
    x1 = jax.random.normal(k1, (B, L, D), dtype=jnp.float32)
    y1 = jax.random.normal(k2, (B, R, D), dtype=jnp.float32)
    M1 = init_interaction_matrix(k3, matching_dim=D, channels=C, init_diag=True)

    out1 = jax.block_until_ready(matching_tensor_forward(x1, y1, M1, normalize=True))
    _check(out1, _reference(x1, y1, M1, normalize=True), "folded/normalize")

    out1b = jax.block_until_ready(matching_tensor_forward(x1, y1, M1, normalize=False))
    _check(out1b, _reference(x1, y1, M1, normalize=False), "folded/no-normalize")

    # Config 2: R > D -> fallback path with direct (B, C, L, R) channel stores
    B2, L2, R2, D2, C2 = 2, 16, 64, 32, 4
    x2 = jax.random.normal(k4, (B2, L2, D2), dtype=jnp.float32)
    y2 = jax.random.normal(k5, (B2, R2, D2), dtype=jnp.float32)
    M2 = init_interaction_matrix(k6, matching_dim=D2, channels=C2, init_diag=False)

    out2 = jax.block_until_ready(matching_tensor_forward(x2, y2, M2, normalize=True))
    _check(out2, _reference(x2, y2, M2, normalize=True), "xmy/normalize")

    print("KERNEL_OK")
</pallas_src>

<mosaic_0001>
module attributes {stable_mosaic.version = 11 : i64} {
  func.func @_matching_kernel_my(%arg0: i32, %arg1: i32, %arg2: memref<1x8x32xf32, #tpu.memory_space<vmem>>, %arg3: memref<1x32x128xf32, #tpu.memory_space<vmem>>, %arg4: memref<1x8x128xf32, #tpu.memory_space<vmem>>) attributes {dimension_semantics = [#tpu.dimension_semantics<parallel>, #tpu.dimension_semantics<parallel>], iteration_bounds = array<i64: 2, 1>, scalar_prefetch = 0 : i64, scratch_operands = 0 : i64, tpu.core_type = #tpu.core_type<tc>, window_params = [{transform_indices = @transform_0, window_bounds = array<i64: 1, 8, 32>}, {transform_indices = @transform_1, window_bounds = array<i64: 1, 32, 128>}, {transform_indices = @transform_2, window_bounds = array<i64: 1, 8, 128>}]} {
    %c0 = arith.constant 0 : index
    %c0_0 = arith.constant 0 : index
    %c0_1 = arith.constant 0 : index
    %0 = vector.load %arg2[%c0, %c0_0, %c0_1] : memref<1x8x32xf32, #tpu.memory_space<vmem>>, vector<1x8x32xf32>
    %1 = vector.shape_cast %0 : vector<1x8x32xf32> to vector<8x32xf32>
    %2 = arith.mulf %1, %1 : vector<8x32xf32>
    %cst = arith.constant dense<0.000000e+00> : vector<8xf32>
    %3 = vector.multi_reduction <add>, %2, %cst [1] : vector<8x32xf32> to vector<8xf32>
    %4 = vector.shape_cast %3 : vector<8xf32> to vector<8x1xf32>
    %cst_2 = arith.constant 1.000000e-24 : f32
    %5 = vector.broadcast %cst_2 : f32 to vector<8x1xf32>
    %6 = arith.maximumf %4, %5 : vector<8x1xf32>
    %7 = math.rsqrt %6 : vector<8x1xf32>
    %8 = vector.broadcast %7 : vector<8x1xf32> to vector<8x32xf32>
    %9 = arith.mulf %1, %8 : vector<8x32xf32>
    %c0_3 = arith.constant 0 : index
    %c0_4 = arith.constant 0 : index
    %c0_5 = arith.constant 0 : index
    %10 = vector.load %arg3[%c0_3, %c0_4, %c0_5] : memref<1x32x128xf32, #tpu.memory_space<vmem>>, vector<1x32x128xf32>
    %11 = vector.shape_cast %10 : vector<1x32x128xf32> to vector<32x128xf32>
    %cst_6 = arith.constant dense<0.000000e+00> : vector<8x128xf32>
    %12 = tpu.matmul %9, %11, %cst_6 {dimension_numbers = #tpu.dot_dimension_numbers<[1], [0], [0], [1], [0, 0, 1, 1], [], []>} : vector<8x32xf32>, vector<32x128xf32>, vector<8x128xf32> -> vector<8x128xf32>
    %c0_7 = arith.constant 0 : index
    %c0_8 = arith.constant 0 : index
    %c0_9 = arith.constant 0 : index
    %13 = vector.load %arg4[%c0_7, %c0_8, %c0_9] : memref<1x8x128xf32, #tpu.memory_space<vmem>>, vector<1x8x128xf32>
    %14 = vector.shape_cast %13 : vector<1x8x128xf32> to vector<8x128xf32>
    %15 = vector.shape_cast %12 : vector<8x128xf32> to vector<1x8x128xf32>
    tpu.vector_store %arg4[%c0_7, %c0_8, %c0_9], %15 {strides = array<i32>} : memref<1x8x128xf32, #tpu.memory_space<vmem>>, vector<1x8x128xf32>,
    return
  }
  func.func @transform_0(%arg0: i32, %arg1: i32) -> (i32, i32, i32) {
    %c0_i32 = arith.constant 0 : i32
    %c0_i32_0 = arith.constant 0 : i32
    return %arg0, %arg1, %c0_i32 : i32, i32, i32
  }
  func.func @transform_1(%arg0: i32, %arg1: i32) -> (i32, i32, i32) {
    %c0_i32 = arith.constant 0 : i32
    %c0_i32_0 = arith.constant 0 : i32
    %c0_i32_1 = arith.constant 0 : i32
    return %arg0, %c0_i32, %c0_i32_0 : i32, i32, i32
  }
  func.func @transform_2(%arg0: i32, %arg1: i32) -> (i32, i32, i32) {
    %c0_i32 = arith.constant 0 : i32
    %c0_i32_0 = arith.constant 0 : i32
    return %arg0, %arg1, %c0_i32 : i32, i32, i32
  }
}

</mosaic_0001>

<llo_original>
// kernel: tpu_custom_call.1
$region0: #{tpu_custom_call.1}
  #allocation0 [shape = 'u32[]', space=smem, size = 0x4, offset = 0x4, fixed_abs, tag = 'smem constant byte address 0x4 - core index']
  #allocation1 [shape = 'u32[144,128]{1,0:T(1,128)}', space=vmem, size = 0x12000, scoped, tag = 'internal scratch']
  %s0 = inlined_call_operand.hbm [shape: f32[2,8,32], index: 0, kind: input, shape index: {}]
  %s1 = inlined_call_operand.hbm [shape: f32[2,32,128], index: 1, kind: input, shape index: {}]
  %s2 = inlined_call_operand.hbm [shape: f32[2,8,128], index: 2, kind: output, shape index: {}]
  %s3 = sld [smem:[#allocation0]]
  $region49: #{tpu_custom_call.1} parent=0
    _
  %s5 = ssub.s32 1, %s3
  %s6 = scalar_select 0, %s5, %s3
  $region1: #{tpu_custom_call.1} parent=0
    #allocation2 [shape = 'u8[8192]{0}', space=vmem, size = 0x2000, scoped, tag = 'input window, operand 0']
    #allocation3 [shape = 's32[2]{0}', space=sflag, size = 0x8, scoped, tag = 'scoped memory for tpu_custom_call.1']
    #allocation4 [shape = 's32[2]{0}', space=sflag, size = 0x8, scoped, tag = 'scoped memory for tpu_custom_call.1']
    #allocation5 [shape = 'u8[32768]{0}', space=vmem, size = 0x8000, scoped, tag = 'input window, operand 1']
    #allocation6 [shape = 's32[2]{0}', space=sflag, size = 0x8, scoped, tag = 'scoped memory for tpu_custom_call.1']
    #allocation7 [shape = 'u8[8192]{0}', space=vmem, size = 0x2000, scoped, tag = 'output window, operand 0']
    %7 = vsyncpa [#allocation3], 0
    %s8 = scalar_lea.sflag [#allocation3], 1
    %9 = vsyncpa %s8, 0
    %10 = vsyncpa [#allocation6], 0
    %s11 = scalar_lea.sflag [#allocation6], 1
    %12 = vsyncpa %s11, 0
    %13 = vsyncpa [#allocation4], 0
    %s14 = scalar_lea.sflag [#allocation4], 1
    %15 = vsyncpa %s14, 0
    loop: start=0, step=1, limit=4
    $region2: #{tpu_custom_call.1} parent=1 // loop_pre_header
      _
    $region3: #{tpu_custom_call.1} parent=1 // loop_header
      %s17 = sphi 0, %s21
      %p18 = scmp.ge.s32.totalorder %s17, 4
      %s24 = sphi 0, %s36
      %s25 = sphi 0, %s32
      %s26 = sphi 0, %s24
      %s27 = sphi 0, %s25
      %s28 = sphi 0, %s26
      %s29 = sphi 0, %s27
      %s41 = sphi 0, %s43
      %s44 = sphi 0, %s41
      %s45 = sphi 0, %s44
      %s61 = sphi 0, %s45
      %s67 = sphi 0, %s69
      %s70 = sphi 0, %s67
      %s71 = sphi 0, %s70
      %s87 = sphi 0, %s71
      %s95 = sphi 0, %s97
      %s98 = sphi 0, %s95
      %s99 = sphi 0, %s98
      %s115 = sphi 0, %s99
    $region4: #{tpu_custom_call.1} parent=1 // loop_header_branch
      %20 = sbr.rel (%p18) target = $region8
    $region5: #{tpu_custom_call.1} parent=1 // loop_body
      %s22 = ssub.s32 %s17, 1
      %s23 = ssub.s32 %s17, 2
      %s30 = sadd.s32 1, %s25
      %p31 = scmp.ge.s32.totalorder %s30, 1
      %s32 = scalar_select %p31, 0, %s30
      %s33 = sadd.s32 1, %s24
      %s34 = scalar_select %p31, %s33, %s24
      %p35 = scmp.ge.s32.totalorder %s34, 2
      %s36 = scalar_select %p35, 0, %s34
      %s37 = ssub.s32 %s24, %s36
      %s38 = ssub.s32 %s25, %s32
      %s39 = sor.u32 %s37, %s38
      %p40 = scmp.eq.s32.totalorder %s39, 0
      %s42 = sadd.s32 %s41, 1
      %s43 = scalar_select %p40, %s41, %s42
      %p46 = pneg %p40
      %p47 = scmp.eq.s32.totalorder %s17, 1
      %p48 = por %p46, %p47
      %p49 = scmp.ne.s32.totalorder %s41, %s44
      %p50 = scmp.eq.s32.totalorder %s17, 0
      %p51 = por %p49, %p50
      %p52 = scmp.ne.s32.totalorder %s41, %s44
      %p53 = scmp.eq.s32.totalorder %s22, 1
      %p54 = por %p52, %p53
      %p55 = scmp.ne.s32.totalorder %s44, %s45
      %p56 = scmp.eq.s32.totalorder %s22, 0
      %p57 = por %p55, %p56
      %p58 = scmp.ne.s32.totalorder %s44, %s45
      %p59 = scmp.eq.s32.totalorder %s23, 1
      %p60 = por %p58, %p59
      %p62 = scmp.ne.s32.totalorder %s45, %s61
      %p63 = scmp.eq.s32.totalorder %s23, 0
      %p64 = por %p62, %p63
      %s65 = ssub.s32 %s24, %s36
      %p66 = scmp.eq.s32.totalorder %s65, 0
      %s68 = sadd.s32 %s67, 1
      %s69 = scalar_select %p66, %s67, %s68
      %p72 = pneg %p66
      %p73 = scmp.eq.s32.totalorder %s17, 1
      %p74 = por %p72, %p73
      %p75 = scmp.ne.s32.totalorder %s67, %s70
      %p76 = scmp.eq.s32.totalorder %s17, 0
      %p77 = por %p75, %p76
      %p78 = scmp.ne.s32.totalorder %s67, %s70
      %p79 = scmp.eq.s32.totalorder %s22, 1
      %p80 = por %p78, %p79
      %p81 = scmp.ne.s32.totalorder %s70, %s71
      %p82 = scmp.eq.s32.totalorder %s22, 0
      %p83 = por %p81, %p82
      %p84 = scmp.ne.s32.totalorder %s70, %s71
      %p85 = scmp.eq.s32.totalorder %s23, 1
      %p86 = por %p84, %p85
      %p88 = scmp.ne.s32.totalorder %s71, %s87
      %p89 = scmp.eq.s32.totalorder %s23, 0
      %p90 = por %p88, %p89
      %s91 = ssub.s32 %s24, %s36
      %s92 = ssub.s32 %s25, %s32
      %s93 = sor.u32 %s91, %s92
      %p94 = scmp.eq.s32.totalorder %s93, 0
      %s96 = sadd.s32 %s95, 1
      %s97 = scalar_select %p94, %s95, %s96
      %p100 = pneg %p94
      %p101 = scmp.eq.s32.totalorder %s17, 1
      %p102 = por %p100, %p101
      %p103 = scmp.ne.s32.totalorder %s95, %s98
      %p104 = scmp.eq.s32.totalorder %s17, 0
      %p105 = por %p103, %p104
      %p106 = scmp.ne.s32.totalorder %s95, %s98
      %p107 = scmp.eq.s32.totalorder %s22, 1
      %p108 = por %p106, %p107
      %p109 = scmp.ne.s32.totalorder %s98, %s99
      %p110 = scmp.eq.s32.totalorder %s22, 0
      %p111 = por %p109, %p110
      %p112 = scmp.ne.s32.totalorder %s98, %s99
      %p113 = scmp.eq.s32.totalorder %s23, 1
      %p114 = por %p112, %p113
      %p116 = scmp.ne.s32.totalorder %s99, %s115
      %p117 = scmp.eq.s32.totalorder %s23, 0
      %p118 = por %p116, %p117
      %p119 = scmp.le.s32.totalorder 1, %s17
      %p120 = scmp.lt.s32.totalorder %s17, 3
      %p121 = pnand %p119, %p120
      %p122 = pneg %p121
      // Predicated region
      $region9: #{tpu_custom_call.1} parent=5 // pred_check
        _
      $region10: #{tpu_custom_call.1} parent=5 // pred_check_branch
        %124 = sbr.rel (%p121) target = $region12
      $region11: #{tpu_custom_call.1} parent=5 // pred_region
        %s125 = ssub.s32 %s17, 1
      $region12: #{tpu_custom_call.1} parent=5 // pred_fallthru
        _
      %p126 = scmp.lt.s32.totalorder %s17, 2
      // Predicated region
      $region13: #{tpu_custom_call.1} parent=5 // pred_check
        %p127 = pneg %p126
      $region14: #{tpu_custom_call.1} parent=5 // pred_check_branch
        %129 = sbr.rel (%p127) target = $region16
      $region15: #{tpu_custom_call.1} parent=5 // pred_region
        // Predicated region
        $region17: #{tpu_custom_call.1} parent=15 // pred_check
          %p130 = pneg %p51
        $region18: #{tpu_custom_call.1} parent=15 // pred_check_branch
          %132 = sbr.rel (%p130) target = $region20
        $region19: #{tpu_custom_call.1} parent=15 // pred_region
          %s133 = sand.u32 %s41, 1
          %s134 = scalar_lea.sflag [#allocation3], %s133
          %s135 = sand.u32 %s41, 1
          %s136 = smul.addr %s135, 8
          %s137 = scalar_lea.vmem [#allocation2], %s136
          %s139 = ssub.s32 128, 128
          %140 = vsyncadd %s134, %s139
          %s141 = sadd.s32 %s25, %s24
          %s142 = smul.addr %s141, 128
          %s143 = scalar_lea.hbm %s0, %s142
          %s145 = sshll.u32 %s137, 4
          %s146 = int_to_ptr.vmem [resolvable:$true] %s145
          %148 = dma.hbm_to_vmem [thread:$0]  %s143, 128, %s146, %s134
        $region20: #{tpu_custom_call.1} parent=15 // pred_fallthru
          _
        // Predicated region
        $region21: #{tpu_custom_call.1} parent=15 // pred_check
          %p149 = pneg %p77
        $region22: #{tpu_custom_call.1} parent=15 // pred_check_branch
          %151 = sbr.rel (%p149) target = $region24
        $region23: #{tpu_custom_call.1} parent=15 // pred_region
          %s152 = sand.u32 %s67, 1
          %s153 = scalar_lea.sflag [#allocation6], %s152
          %s154 = sand.u32 %s67, 1
          %s155 = smul.addr %s154, 32
          %s156 = scalar_lea.vmem [#allocation5], %s155
          %s158 = ssub.s32 512, 512
          %159 = vsyncadd %s153, %s158
          %s160 = smul.addr %s24, 4
          %s161 = smul.addr %s160, 128
          %s162 = scalar_lea.hbm %s1, %s161
          %s163 = sshll.u32 %s156, 4
          %s164 = int_to_ptr.vmem [resolvable:$true] %s163
          %169 = dma.hbm_to_vmem [thread:$0]  %s162, 512, %s164, %s153, 128, 128, 8
        $region24: #{tpu_custom_call.1} parent=15 // pred_fallthru
          _
      $region16: #{tpu_custom_call.1} parent=5 // pred_fallthru
        _
      %p170 = scmp.le.s32.totalorder 1, %s17
      %p171 = scmp.lt.s32.totalorder %s17, 3
      %p172 = pnand %p170, %p171
      %p173 = pneg %p172
      // Predicated region
      $region25: #{tpu_custom_call.1} parent=5 // pred_check
        _
      $region26: #{tpu_custom_call.1} parent=5 // pred_check_branch
        %175 = sbr.rel (%p172) target = $region28
      $region27: #{tpu_custom_call.1} parent=5 // pred_region
        %s176 = ssub.s32 %s17, 1
        %s177 = sand.u32 %s44, 1
        %s178 = scalar_lea.sflag [#allocation3], %s177
        %s179 = sand.u32 %s44, 1
        %s180 = smul.addr %s179, 8
        %s181 = scalar_lea.vmem [#allocation2], %s180
        // Predicated region
        $region29: #{tpu_custom_call.1} parent=27 // pred_check
          %p182 = pneg %p57
        $region30: #{tpu_custom_call.1} parent=27 // pred_check_branch
          %184 = sbr.rel (%p182) target = $region32
        $region31: #{tpu_custom_call.1} parent=27 // pred_region
          %185 = dma.done %s178, 128
        $region32: #{tpu_custom_call.1} parent=27 // pred_fallthru
          _
        %s186 = sand.u32 %s70, 1
        %s187 = scalar_lea.sflag [#allocation6], %s186
        %s188 = sand.u32 %s70, 1
        %s189 = smul.addr %s188, 32
        %s190 = scalar_lea.vmem [#allocation5], %s189
        // Predicated region
        $region33: #{tpu_custom_call.1} parent=27 // pred_check
          %p191 = pneg %p83
        $region34: #{tpu_custom_call.1} parent=27 // pred_check_branch
          %193 = sbr.rel (%p191) target = $region36
        $region35: #{tpu_custom_call.1} parent=27 // pred_region
          %194 = dma.done %s187, 512
        $region36: #{tpu_custom_call.1} parent=27 // pred_fallthru
          _
        %s195 = sand.u32 %s44, 1
        %s196 = scalar_lea.sflag [#allocation3], %s195
        %s197 = sand.u32 %s44, 1
        %s198 = smul.addr %s197, 8
        %s199 = scalar_lea.vmem [#allocation2], %s198
        %p200 = pneg %p57
        %p201 = pneg %p54
        %s202 = sand.u32 %s70, 1
        %s203 = scalar_lea.sflag [#allocation6], %s202
        %s204 = sand.u32 %s70, 1
        %s205 = smul.addr %s204, 32
        %s206 = scalar_lea.vmem [#allocation5], %s205
        %p207 = pneg %p83
        %p208 = pneg %p80
        %p209 = pneg %p111
        %p210 = pneg %p108
        %s211 = sand.u32 %s98, 1
        %s212 = scalar_lea.sflag [#allocation4], %s211
        %s213 = sand.u32 %s98, 1
        %s214 = smul.addr %s213, 8
        %s215 = scalar_lea.vmem [#allocation7], %s214
        %v216 = vld [vmem:[%s181] sm:$0xff]
        %v217 = vmul.f32 %v216, %v216
        %vm218 = vcmask 261120
        %v219 = vsel %vm218, %v217, 0.0
        %220 = vadd.xlane.f32.xlu0 %v219
        %v221 = vpop.xlane.xlu0 %220
        %v222 = vmax.f32 %v221, 1e-24
        %v223 = vrsqrt.pop %v222
        %v224 = vmul.f32 %v216, %v223
        %v225 = vld [vmem:[%s190] sm:$0xff]
        %v226 = vld [vmem:[%s190 + $0x8] sm:$0xff]
        %v227 = vld [vmem:[%s190 + $0x10] sm:$0xff]
        %v228 = vld [vmem:[%s190 + $0x18] sm:$0xff]
        %v230 = vsel %vm218, %v224, 0
        %232 = vmatprep.subr.mxu0 0.0
        %233 = vmatpush1.msra.mxu0 0.0
        %234 = vmatprep.subr.mxu0 0.0
        %235 = vmatpush1.msra.mxu0 0.0
        %236 = vmatprep.subr.mxu0 0.0
        %237 = vmatpush1.msra.mxu0 0.0
        %238 = vmatprep.subr.mxu0 0.0
        %239 = vmatpush1.msra.mxu0 0.0
        %240 = vmatprep.subr.mxu0 0.0
        %241 = vmatpush1.msra.mxu0 0.0
        %242 = vmatprep.subr.mxu0 0.0
        %243 = vmatpush1.msra.mxu0 0.0
        %244 = vmatprep.subr.mxu0 0.0
        %245 = vmatpush1.msra.mxu0 0.0
        %246 = vmatprep.subr.mxu0 0.0
        %247 = vmatpush1.msra.mxu0 0.0
        %248 = vmatprep.subr.mxu0 0.0
        %249 = vmatpush1.msra.mxu0 0.0
        %250 = vmatprep.subr.mxu0 0.0
        %251 = vmatpush1.msra.mxu0 0.0
        %252 = vmatprep.subr.mxu0 0.0
        %253 = vmatpush1.msra.mxu0 0.0
        %254 = vmatprep.subr.mxu0 0.0
        %255 = vmatpush1.msra.mxu0 0.0
        %256 = vmatprep.subr.mxu0 0.0
        %257 = vmatpush1.msra.mxu0 %v228
        %258 = vmatprep.subr.mxu0 0.0
        %259 = vmatpush1.msra.mxu0 %v227
        %260 = vmatprep.subr.mxu0 0.0
        %261 = vmatpush1.msra.mxu0 %v226
        %262 = vmatprep.subr.mxu0 0.0
        %263 = vmatpush1.msra.mxu0 %v225
        %264 = vmatprep.subr.mxu0 0.0
        %265 = vmatpush2.msra.mxu0 0.0
        %266 = vmatprep.subr.mxu0 0.0
        %267 = vmatpush2.msra.mxu0 0.0
        %268 = vmatprep.subr.mxu0 0.0
        %269 = vmatpush2.msra.mxu0 0.0
        %270 = vmatprep.subr.mxu0 0.0
        %271 = vmatpush2.msra.mxu0 0.0
        %272 = vmatprep.subr.mxu0 0.0
        %273 = vmatpush2.msra.mxu0 0.0
        %274 = vmatprep.subr.mxu0 0.0
        %275 = vmatpush2.msra.mxu0 0.0
        %276 = vmatprep.subr.mxu0 0.0
        %277 = vmatpush2.msra.mxu0 0.0
        %278 = vmatprep.subr.mxu0 0.0
        %279 = vmatpush2.msra.mxu0 0.0
        %280 = vmatprep.subr.mxu0 0.0
        %281 = vmatpush2.msra.mxu0 0.0
        %282 = vmatprep.subr.mxu0 0.0
        %283 = vmatpush2.msra.mxu0 0.0
        %284 = vmatprep.subr.mxu0 0.0
        %285 = vmatpush2.msra.mxu0 0.0
        %286 = vmatprep.subr.mxu0 0.0
        %287 = vmatpush2.msra.mxu0 0.0
        %288 = vmatprep.subr.mxu0 0.0
        %289 = vmatpush2.msra.mxu0 0.0
        %290 = vmatprep.subr.mxu0 0.0
        %291 = vmatpush2.msra.mxu0 0.0
        %292 = vmatprep.subr.mxu0 0.0
        %293 = vmatpush2.msra.mxu0 0.0
        %294 = vmatprep.subr.mxu0 0.0
        %295 = vmatpush2.msra.mxu0 0.0
        %296 = vmatprep.mubr.f32.mxu0 0.0
        %297 = vmatmul.mubr.f32.gmra.mxu0 %v230
        %v298 = vpop.f32.mrf.mxu0
        %v299 = vadd.f32 0.0, %v298
        %v300 = vpop.f32.mrf.mxu0
        %301 = vdwg.mxu0
        %302 = vst [vmem:[%s215] sm:$0xff] %v299
        %s303 = sand.u32 %s98, 1
        %s304 = scalar_lea.sflag [#allocation4], %s303
        %s305 = sand.u32 %s98, 1
        %s306 = smul.addr %s305, 8
        %s307 = scalar_lea.vmem [#allocation7], %s306
        // Predicated region
        $region37: #{tpu_custom_call.1} parent=27 // pred_check
          %p308 = pneg %p108
        $region38: #{tpu_custom_call.1} parent=27 // pred_check_branch
          %310 = sbr.rel (%p308) target = $region40
        $region39: #{tpu_custom_call.1} parent=27 // pred_region
          %s312 = ssub.s32 128, 128
          %313 = vsyncadd %s304, %s312
          %s314 = sadd.s32 %s27, %s26
          %s315 = smul.addr %s314, 128
          %s316 = scalar_lea.hbm %s2, %s315
          %s318 = sshll.u32 %s307, 4
          %s319 = int_to_ptr.vmem [resolvable:$true] %s318
          %321 = dma.vmem_to_hbm [thread:$0]  %s319, 128, %s316, %s304
        $region40: #{tpu_custom_call.1} parent=27 // pred_fallthru
          _
      $region28: #{tpu_custom_call.1} parent=5 // pred_fallthru
        _
      %p322 = scmp.le.s32.totalorder 2, %s17
      // Predicated region
      $region41: #{tpu_custom_call.1} parent=5 // pred_check
        %p323 = pneg %p322
      $region42: #{tpu_custom_call.1} parent=5 // pred_check_branch
        %325 = sbr.rel (%p323) target = $region44
      $region43: #{tpu_custom_call.1} parent=5 // pred_region
        %s326 = ssub.s32 %s17, 2
        // Predicated region
        $region45: #{tpu_custom_call.1} parent=43 // pred_check
          %p327 = pneg %p114
        $region46: #{tpu_custom_call.1} parent=43 // pred_check_branch
          %329 = sbr.rel (%p327) target = $region48
        $region47: #{tpu_custom_call.1} parent=43 // pred_region
          %s330 = sand.u32 %s99, 1
          %s331 = scalar_lea.sflag [#allocation4], %s330
          %s332 = sand.u32 %s99, 1
          %s333 = smul.addr %s332, 8
          %s334 = scalar_lea.vmem [#allocation7], %s333
          %335 = dma.done %s331, 128
        $region48: #{tpu_custom_call.1} parent=43 // pred_fallthru
          _
      $region44: #{tpu_custom_call.1} parent=5 // pred_fallthru
        _
    $region6: #{tpu_custom_call.1} parent=1 // loop_footer
      %s21 = sadd.s32 1, %s17
    $region7: #{tpu_custom_call.1} parent=1 // loop_footer_branch
      %16 = sbr.rel target = $region3
    $region8: #{tpu_custom_call.1} parent=1 // loop_exit
      _
    %336 = vsyncpa [#allocation3], 1
    %s337 = scalar_lea.sflag [#allocation3], 1
    %338 = vsyncpa %s337, 1
    %339 = vsyncpa [#allocation6], 1
    %s340 = scalar_lea.sflag [#allocation6], 1
    %341 = vsyncpa %s340, 1
    %342 = vsyncpa [#allocation4], 1
    %s343 = scalar_lea.sflag [#allocation4], 1
    %344 = vsyncpa %s343, 1

</llo_original>
